<compile_context>
chip_gen: v7x
topology: tpu7x:2x2x1
jax: 0.10.0
libtpu: 0.0.40
codegen_flags: <defaults>
</compile_context>

<pallas_src>
import numpy as np
import jax
import jax.numpy as jnp
from jax.experimental import pallas as pl
from jax.experimental.pallas import tpu as pltpu


# ---------------------------------------------------------------------------
# Fused-layout geometry (all per-image lane counts are multiples of 128)
# ---------------------------------------------------------------------------
W0 = 32            # stage 0: 28x28 image padded to 28 rows x 32 cols
L0 = 28 * W0       # 896 lanes / image
W1 = 16            # stage 1: pooled 12x12 lives at rows/cols 1..12 of a 16x16 frame
L1 = 16 * W1       # 256 lanes / image
W2 = 16            # stage 2: pooled 4x4 lives at rows/cols 1..4 of an 8x16 frame
L2 = 8 * W2        # 128 lanes / image

IMG_B = 8          # images fused per grid step


def _build_constants():
    """0/1 selection matrices (pool compaction / valid-feature extract) + validity masks."""
    sel1 = np.zeros((L0, L1), np.float32)          # stride-2 12x12 (W0 frame) -> interior 16x16
    for a in range(12):
        for b in range(12):
            sel1[(2 * a) * W0 + 2 * b, (a + 1) * W1 + (b + 1)] = 1.0
    sel2 = np.zeros((L1, L2), np.float32)          # stride-2 4x4 (W1 frame) -> interior 8x16
    for a in range(4):
        for b in range(4):
            sel2[(2 * a) * W1 + 2 * b, (a + 1) * W2 + (b + 1)] = 1.0
    sel3 = np.zeros((L2, 16), np.float32)          # top-left 4x4 of 8x16 frame -> 16 flat feats
    for h in range(4):
        for w in range(4):
            sel3[h * W2 + w, h * 4 + w] = 1.0
    m12 = np.zeros((1, L1), np.float32)            # top-left 12x12 validity mask
    for a in range(12):
        for b in range(12):
            m12[0, a * W1 + b] = 1.0
    m4 = np.zeros((1, L2), np.float32)             # top-left 4x4 validity mask
    for a in range(4):
        for b in range(4):
            m4[0, a * W2 + b] = 1.0
    return sel1, sel2, sel3, m12, m4


# ---------------------------------------------------------------------------
# The fused kernel (one grid step == IMG_B images)
# ---------------------------------------------------------------------------
def _make_kernel(roll_like_jnp, nb):
    f32, bf16 = jnp.float32, jnp.bfloat16

    def shift_read(v, d):
        # out[..., i] = v[..., (i + d) % total]   ("read d lanes ahead")
        total = v.shape[-1]
        d = d % total
        if d == 0:
            return v
        amt = (total - d) if roll_like_jnp else d
        return pltpu.roll(v, amt, 1)

    def shift_write(v, d):
        # out[..., i] = v[..., (i - d) % total]   ("push data d lanes forward")
        total = v.shape[-1]
        d = d % total
        if d == 0:
            return v
        amt = d if roll_like_jnp else (total - d)
        return pltpu.roll(v, amt, 1)

    def tap_stack(act_h, ksize, width):
        # act_h (bf16, cast ONCE by the caller): (C, nb*S) -> (K*K*C, nb*S)
        return jnp.concatenate(
            [shift_read(act_h, i * width + j)
             for i in range(ksize) for j in range(ksize)], axis=0)

    def per_image_matmul(act, sel, s_in, s_out):
        # act: (C, nb*s_in), sel: (s_in, s_out)  ->  (C, nb*s_out); per-image blocks are
        # 128-aligned lane slices, so slicing/concat is cheap.
        pieces = [jnp.dot(act[:, b * s_in:(b + 1) * s_in], sel,
                          preferred_element_type=f32) for b in range(nb)]
        return jnp.concatenate(pieces, axis=1)

    def kernel(x_ref, w1_ref, b1_ref, sel1_ref, m12_ref, k1_ref, b1r_ref,
               w2_ref, b2_ref, sel2_ref, m4_ref, k2_ref, b2r_ref, sel3_ref,
               o_ref):
        # ---- conv1: 5x5 valid, Cin=1, as ONE MXU matmul over a 25-tap stack --------
        xf = x_ref[0]                                                   # (1, nb*L0) f32
        xs = jnp.concatenate(
            [shift_read(xf, i * W0 + j) for i in range(5) for j in range(5)],
            axis=0).astype(bf16)                                        # (25, nb*L0)
        a = jnp.dot(w1_ref[...], xs, preferred_element_type=f32)        # (16, nb*L0)
        a = jnp.maximum(a + b1_ref[...], 0.0)                           # valid h,w < 24

        # ---- fused 2x2/2 maxpool + per-image compaction GEMM (-> 16x16 frames) -----
        p = a
        for di, dj in ((0, 1), (1, 0), (1, 1)):
            p = jnp.maximum(p, shift_read(a, di * W0 + dj))
        a1 = per_image_matmul(p.astype(bf16), sel1_ref[...], L0, L1)    # (16, nb*L1) f32

        # ---- residual block 1 (same 3x3 conv + bias applied twice) -----------------
        a1h = a1.astype(bf16)
        y = jnp.dot(k1_ref[...], tap_stack(a1h, 3, W1), preferred_element_type=f32)
        y = jnp.maximum(y + b1r_ref[...], 0.0)
        ye = shift_write(y * m12_ref[...], W1 + 1).astype(bf16)         # re-embed, zero border
        z = jnp.dot(k1_ref[...], tap_stack(ye, 3, W1), preferred_element_type=f32)
        z = z + b1r_ref[...]
        r1 = jnp.maximum(z + shift_read(a1, W1 + 1), 0.0)               # valid top-left 12x12

        # ---- conv2: 5x5 valid + bias + ReLU, fused 2x2 maxpool + compaction --------
        r1h = r1.astype(bf16)
        c2 = jnp.dot(w2_ref[...], tap_stack(r1h, 5, W1), preferred_element_type=f32)
        c2 = jnp.maximum(c2 + b2_ref[...], 0.0)
        p2 = c2
        for di, dj in ((0, 1), (1, 0), (1, 1)):
            p2 = jnp.maximum(p2, shift_read(c2, di * W1 + dj))
        a2 = per_image_matmul(p2.astype(bf16), sel2_ref[...], L1, L2)   # (32, nb*L2) f32

        # ---- residual block 2 -------------------------------------------------------
        a2h = a2.astype(bf16)
        y2 = jnp.dot(k2_ref[...], tap_stack(a2h, 3, W2), preferred_element_type=f32)
        y2 = jnp.maximum(y2 + b2r_ref[...], 0.0)
        y2e = shift_write(y2 * m4_ref[...], W2 + 1).astype(bf16)
        z2 = jnp.dot(k2_ref[...], tap_stack(y2e, 3, W2), preferred_element_type=f32)
        z2 = z2 + b2r_ref[...]
        r2 = jnp.maximum(z2 + shift_read(a2, W2 + 1), 0.0)              # valid top-left 4x4

        # ---- compact the 4x4 valid features: lane-dense (32, nb*16) output slab ----
        o_ref[0] = per_image_matmul(r2, sel3_ref[...], L2, 16)          # exact f32 selection

    return kernel


def build_forward(roll_like_jnp, img_b=IMG_B):
    kernel = _make_kernel(roll_like_jnp, img_b)

    def fwd(packed, x_nchw):
        n = x_nchw.shape[0]
        n_pad = -(-n // img_b) * img_b
        steps = n_pad // img_b
        x = jnp.pad(x_nchw.astype(jnp.float32),
                    ((0, n_pad - n), (0, 0), (0, 0), (0, W0 - 28)))      # 28 -> 32 cols
        x = x.reshape(n_pad, L0).reshape(steps, 1, img_b * L0)

        m12b = jnp.tile(packed["m12"], (1, img_b))                       # per-image periodic masks
        m4b = jnp.tile(packed["m4"], (1, img_b))

        operands = (x, packed["w1"], packed["b1"], packed["sel1"], m12b,
                    packed["k1"], packed["b1r"], packed["w2"], packed["b2"],
                    packed["sel2"], m4b, packed["k2"], packed["b2r"],
                    packed["sel3"])

        def whole(a):     # whole-array block, resident across the batch grid
            return pl.BlockSpec(a.shape, lambda i, nd=a.ndim: (0,) * nd)

        in_specs = [pl.BlockSpec((1, 1, img_b * L0), lambda i: (i, 0, 0))]
        in_specs += [whole(a) for a in operands[1:]]

        feats = pl.pallas_call(
            kernel,
            out_shape=jax.ShapeDtypeStruct((steps, 32, img_b * 16), jnp.float32),
            grid_spec=pltpu.PrefetchScalarGridSpec(
                num_scalar_prefetch=0,
                grid=(steps,),
                in_specs=in_specs,
                out_specs=pl.BlockSpec((1, 32, img_b * 16), lambda i: (i, 0, 0)),
            ),
            compiler_params=pltpu.CompilerParams(
                dimension_semantics=("parallel",)),
        )(*operands)

        # PyTorch NCHW view(batch,-1) flatten + fc, as one XLA dot on the whole batch.
        feats = feats.reshape(steps, 32, img_b, 16).transpose(0, 2, 1, 3)
        feats = feats.reshape(n_pad, 512)[:n]
        return feats @ packed["fc_w"].T + packed["fc_b"]

    return fwd


# ---------------------------------------------------------------------------
# Parameters (PyTorch-shaped) and one-time packing into kernel layout
# ---------------------------------------------------------------------------
def init_params(key):
    ks = jax.random.split(key, 10)

    def conv_w(k, cout, cin, ksz):
        fan_in = cin * ksz * ksz
        return jax.random.normal(k, (cout, cin, ksz, ksz), jnp.float32) / np.sqrt(fan_in)

    return {
        "conv1_w": conv_w(ks[0], 16, 1, 5),
        "conv1_b": 0.01 * jax.random.normal(ks[1], (16,), jnp.float32),
        "conv2_w": conv_w(ks[2], 32, 16, 5),
        "conv2_b": 0.01 * jax.random.normal(ks[3], (32,), jnp.float32),
        "rb1_w": conv_w(ks[4], 16, 16, 3),
        "rb1_b": 0.01 * jax.random.normal(ks[5], (16,), jnp.float32),
        "rb2_w": conv_w(ks[6], 32, 32, 3),
        "rb2_b": 0.01 * jax.random.normal(ks[7], (32,), jnp.float32),
        "fc_w": jax.random.normal(ks[8], (10, 512), jnp.float32) / np.sqrt(512.0),
        "fc_b": 0.01 * jax.random.normal(ks[9], (10,), jnp.float32),
    }


def pack_params(params):
    sel1, sel2, sel3, m12, m4 = _build_constants()

    def taps(w, dtype):   # (Cout,Cin,KH,KW) -> (Cout, KH*KW*Cin), matching tap_stack row order
        cout, cin, kh, kw = w.shape
        return jnp.transpose(w, (0, 2, 3, 1)).reshape(cout, kh * kw * cin).astype(dtype)

    return {
        "w1": taps(params["conv1_w"], jnp.bfloat16),      # (16, 25)
        "b1": params["conv1_b"].reshape(16, 1),
        "k1": taps(params["rb1_w"], jnp.bfloat16),        # (16, 144)
        "b1r": params["rb1_b"].reshape(16, 1),
        "w2": taps(params["conv2_w"], jnp.bfloat16),      # (32, 400)
        "b2": params["conv2_b"].reshape(32, 1),
        "k2": taps(params["rb2_w"], jnp.bfloat16),        # (32, 288)
        "b2r": params["rb2_b"].reshape(32, 1),
        "sel1": jnp.asarray(sel1, jnp.bfloat16),          # (896, 256)
        "sel2": jnp.asarray(sel2, jnp.bfloat16),          # (256, 128)
        "sel3": jnp.asarray(sel3, jnp.float32),           # (128, 16)  exact f32 selection
        "m12": jnp.asarray(m12),                          # (1, 256)
        "m4": jnp.asarray(m4),                            # (1, 128)
        "fc_w": params["fc_w"],
        "fc_b": params["fc_b"],
    }


# ---------------------------------------------------------------------------
# Pure-JAX reference of the original PyTorch module (for validation)
# ---------------------------------------------------------------------------
def reference_forward(params, x):
    def conv(x, w, b, padding):
        out = jax.lax.conv_general_dilated(
            x, w, (1, 1), padding, dimension_numbers=("NCHW", "OIHW", "NCHW"))
        return out + b.reshape(1, -1, 1, 1)

    def maxpool2(x):
        return jax.lax.reduce_window(x, -jnp.inf, jax.lax.max,
                                     (1, 1, 2, 2), (1, 1, 2, 2), "VALID")

    y = maxpool2(jax.nn.relu(conv(x, params["conv1_w"], params["conv1_b"], "VALID")))
    t = jax.nn.relu(conv(y, params["rb1_w"], params["rb1_b"], "SAME"))
    t = conv(t, params["rb1_w"], params["rb1_b"], "SAME")
    y = jax.nn.relu(y + t)
    y = maxpool2(jax.nn.relu(conv(y, params["conv2_w"], params["conv2_b"], "VALID")))
    t = jax.nn.relu(conv(y, params["rb2_w"], params["rb2_b"], "SAME"))
    t = conv(t, params["rb2_w"], params["rb2_b"], "SAME")
    y = jax.nn.relu(y + t)
    y = y.reshape(y.shape[0], -1)
    return y @ params["fc_w"].T + params["fc_b"]


def _detect_roll_like_jnp():
    """Probe pltpu.roll's shift convention once so the fused kernel is convention-proof."""
    x = jnp.arange(2 * 128, dtype=jnp.float32).reshape(2, 128)

    def k(x_ref, o_ref):
        o_ref[...] = pltpu.roll(x_ref[...], 1, 1)

    y = pl.pallas_call(k, out_shape=jax.ShapeDtypeStruct((2, 128), jnp.float32))(x)
    return bool(jnp.array_equal(y, jnp.roll(x, 1, axis=1)))


# ---------------------------------------------------------------------------
if __name__ == "__main__":
    key = jax.random.PRNGKey(0)
    pkey, xkey = jax.random.split(key)
    params = init_params(pkey)
    packed = pack_params(params)
    # PyTorch-style NCHW input; 28x28 single channel is forced by fc(512, 10) = 32*4*4.
    # batch = 12 exercises both batch padding (-> 16) and a multi-step (even) grid.
    x = jax.random.normal(xkey, (12, 1, 28, 28), jnp.float32)

    fwd = jax.jit(build_forward(_detect_roll_like_jnp()))
    out = jax.block_until_ready(fwd(packed, x))

    assert out.shape == (12, 10), out.shape
    assert bool(jnp.all(jnp.isfinite(out)))
    ref = reference_forward(params, x)
    err = float(jnp.max(jnp.abs(out - ref))) / (float(jnp.max(jnp.abs(ref))) + 1e-6)
    assert err < 2.5e-2, f"mismatch vs reference: rel_err={err}"
    print("KERNEL_OK")
</pallas_src>

<mosaic_0001>
module attributes {stable_mosaic.version = 11 : i64} {
  func.func @k(%arg0: memref<2x128xf32, #tpu.memory_space<vmem>>, %arg1: memref<2x128xf32, #tpu.memory_space<vmem>>) attributes {dimension_semantics = [], scalar_prefetch = 0 : i64, scratch_operands = 0 : i64, tpu.core_type = #tpu.core_type<tc>} {
    %c0 = arith.constant 0 : index
    %c0_0 = arith.constant 0 : index
    %0 = vector.load %arg0[%c0, %c0_0] : memref<2x128xf32, #tpu.memory_space<vmem>>, vector<2x128xf32>
    %c1_i32 = arith.constant 1 : i32
    %1 = tpu.dynamic_rotate %0 by %c1_i32 dim 1 : vector<2x128xf32>, i32 -> vector<2x128xf32>
    %c0_1 = arith.constant 0 : index
    %c0_2 = arith.constant 0 : index
    %2 = vector.load %arg1[%c0_1, %c0_2] : memref<2x128xf32, #tpu.memory_space<vmem>>, vector<2x128xf32>
    tpu.vector_store %arg1[%c0_1, %c0_2], %1 {strides = array<i32>} : memref<2x128xf32, #tpu.memory_space<vmem>>, vector<2x128xf32>,
    return
  }
}

</mosaic_0001>

<llo_original>
// kernel: tpu_custom_call.1
$region0: #{tpu_custom_call.1}
  #allocation0 [shape = 'u32[]', space=smem, size = 0x4, offset = 0x4, fixed_abs, tag = 'smem constant byte address 0x4 - core index']
  #allocation1 [shape = 'u32[144,128]{1,0:T(1,128)}', space=vmem, size = 0x12000, scoped, tag = 'internal scratch']
  %s0 = inlined_call_operand.hbm [shape: f32[2,128], index: 0, kind: input, shape index: {}]
  %s1 = inlined_call_operand.hbm [shape: f32[2,128], index: 1, kind: output, shape index: {}]
  %s2 = sld [smem:[#allocation0]]
  $region18: #{tpu_custom_call.1} parent=0
    _
  %s4 = ssub.s32 1, %s2
  %s5 = scalar_select 0, %s4, %s2
  $region1: #{tpu_custom_call.1} parent=0
    #allocation2 [shape = 'u8[1024]{0}', space=vmem, size = 0x400, scoped, tag = 'input window, operand 0, single buffered']
    #allocation3 [shape = 's32[1]{0}', space=sflag, size = 0x4, scoped, tag = 'scoped memory for tpu_custom_call.1']
    #allocation4 [shape = 's32[1]{0}', space=sflag, size = 0x4, scoped, tag = 'scoped memory for tpu_custom_call.1']
    #allocation5 [shape = 'u8[1024]{0}', space=vmem, size = 0x400, scoped, tag = 'output window, operand 0, single buffered']
    %6 = vsyncpa [#allocation3], 0
    %7 = vsyncpa [#allocation4], 0
    // Predicated region
    $region2: #{tpu_custom_call.1} parent=1 // pred_check
      _
    $region3: #{tpu_custom_call.1} parent=1 // pred_check_branch
      %9 = sbr.rel (0) target = $region5
    $region4: #{tpu_custom_call.1} parent=1 // pred_region
      %s11 = ssub.s32 32, 32
      %12 = vsyncadd [#allocation3], %s11
      %s14 = sshll.u32 [#allocation2], 4
      %s15 = int_to_ptr.vmem [resolvable:$true] %s14
      %17 = dma.hbm_to_vmem [thread:$0]  %s0, 32, %s15, [#allocation3]
    $region5: #{tpu_custom_call.1} parent=1 // pred_fallthru
      _
    // Predicated region
    $region6: #{tpu_custom_call.1} parent=1 // pred_check
      _
    $region7: #{tpu_custom_call.1} parent=1 // pred_check_branch
      %19 = sbr.rel (0) target = $region9
    $region8: #{tpu_custom_call.1} parent=1 // pred_region
      %20 = dma.done [#allocation3], 32
    $region9: #{tpu_custom_call.1} parent=1 // pred_fallthru
      _
    %v21 = vld [vmem:[#allocation2] sm:$0x3]
    %22 = vrot.lane.b32.xlu0 %v21, 1
    %v23 = vpop.permute.xlu0 %22
    %24 = vst [vmem:[#allocation5] sm:$0x3] %v23
    // Predicated region
    $region10: #{tpu_custom_call.1} parent=1 // pred_check
      _
    $region11: #{tpu_custom_call.1} parent=1 // pred_check_branch
      %26 = sbr.rel (0) target = $region13
    $region12: #{tpu_custom_call.1} parent=1 // pred_region
      %s28 = ssub.s32 32, 32
      %29 = vsyncadd [#allocation4], %s28
      %s31 = sshll.u32 [#allocation5], 4
      %s32 = int_to_ptr.vmem [resolvable:$true] %s31
      %34 = dma.vmem_to_hbm [thread:$0]  %s32, 32, %s1, [#allocation4]
    $region13: #{tpu_custom_call.1} parent=1 // pred_fallthru
      _
    // Predicated region
    $region14: #{tpu_custom_call.1} parent=1 // pred_check
      _
    $region15: #{tpu_custom_call.1} parent=1 // pred_check_branch
      %36 = sbr.rel (0) target = $region17
    $region16: #{tpu_custom_call.1} parent=1 // pred_region
      %37 = dma.done [#allocation4], 32
    $region17: #{tpu_custom_call.1} parent=1 // pred_fallthru
      _
    %38 = vsyncpa [#allocation3], 1
    %39 = vsyncpa [#allocation4], 1

</llo_original>
